<compile_context>
chip_gen: v5e
topology: v5e:2x2
jax: 0.10.0
libtpu: 0.0.40
codegen_flags: <defaults>
</compile_context>

<pallas_src>
import functools
import warnings

import jax
import jax.numpy as jnp
from jax.experimental import pallas as pl
from jax.experimental.pallas import tpu as pltpu


def _drs_kernel(x_ref, o_ref, *, delta):
    # Tile shape: (row_block, H*W). Rows are independent (one (b, c) map each).
    x = jnp.maximum(x_ref[...], 0.0)                   # ReLU         (VPU)
    x_max = jnp.max(x, axis=-1, keepdims=True)         # per-row max  (XLU)
    o_ref[...] = jnp.minimum(x, x_max * delta)         # suppressor   (VPU)


def _sublane_multiple(dtype) -> int:
    # Native sublane tile: 8 rows for 32-bit, 16 for bf16, 32 for int8/fp8.
    itemsize = jnp.dtype(dtype).itemsize
    return max(8, 32 // itemsize)


def _vmem_capacity_bytes() -> int:
    try:
        return int(pltpu.get_tpu_info().vmem_capacity_bytes)
    except Exception:
        # Explicit, *warned* fallback (v7x-sized 64 MiB per TensorCore) so
        # off-device / AOT builds don't silently ship conservative tiles to
        # 128 MiB parts without anyone noticing.
        warnings.warn(
            "DRS Pallas kernel: could not query TPU VMEM capacity; assuming "
            "64 MiB (v7x-sized, conservative tiles)."
        )
        return 64 << 20


def _pick_row_block(bc: int, hw: int, dtype) -> tuple[int, int]:
    """Pick (row_block, vmem_limit_bytes) for the (bc, hw) problem."""
    itemsize = jnp.dtype(dtype).itemsize
    sub = _sublane_multiple(dtype)
    row_bytes = hw * itemsize
    sub_tile_bytes = sub * row_bytes
    n_sub = pl.cdiv(bc, sub)                 # sublane-aligned row groups
    total_bytes = n_sub * sub_tile_bytes

    vmem_cap = _vmem_capacity_bytes()
    # Per-generation tile cap: 8 MiB on 128 MiB-VMEM parts (v5e/v6e), 4 MiB on
    # 64 MiB parts (v7x). Roofline saturates (~85-86%) at MiB-scale tiles;
    # bigger only amortizes the ~0.35 us/step grid overhead.
    tile_cap = (8 << 20) if vmem_cap >= (96 << 20) else (4 << 20)
    # Per grid step VMEM: 2 double-buffered input tiles + 2 output tiles +
    # ~1 tile of in-kernel temporaries (the materialized relu(x)).
    budget = max(sub_tile_bytes,
                 min(tile_cap, ((vmem_cap * 3) // 4 - (4 << 20)) // 5))
    max_sub_per_step = max(1, budget // sub_tile_bytes)

    # Minimum step count: >= 2 once there are >= 2 row groups so v7x's two
    # TensorCores both get work; >= 4 (2 tiles per core, keeps each core's
    # DMA/compute pipeline full) once there is enough traffic to amortize it.
    min_steps = 1
    if n_sub >= 2:
        min_steps = 2
    if n_sub >= 4 and total_bytes >= (4 << 20):
        min_steps = 4

    n0 = max(min_steps, pl.cdiv(n_sub, max_sub_per_step))

    def steps_for(per_step_sub):
        return pl.cdiv(n_sub, per_step_sub)

    rb_sub = max(1, min(max_sub_per_step, pl.cdiv(n_sub, n0)))
    if n_sub >= 2 and steps_for(rb_sub) % 2 != 0:
        # Best-effort bounded search for an even step count so the two v7x
        # TensorCores get balanced tile counts (odd counts -> up to ~33% idle).
        for target in range(n0, min(n0 + 16, n_sub) + 1):
            cand = max(1, min(max_sub_per_step, pl.cdiv(n_sub, target)))
            if steps_for(cand) % 2 == 0:
                rb_sub = cand
                break

    rb = rb_sub * sub
    tile_bytes = rb * row_bytes
    # 2 in + 2 out double buffers + 1 tile of in-kernel temps + headroom,
    # clamped to 75% of physical VMEM (tightest on v7x's 64 MiB).
    vmem_limit = 5 * tile_bytes + (4 << 20)
    vmem_limit = int(max(16 << 20, min(vmem_limit, (vmem_cap * 3) // 4)))

    # TODO(synk): rows with H*W so large that even a single sublane-group tile
    # (sub x H*W) blows the VMEM budget need a two-pass (lane-tiled max-reduce,
    # then apply) kernel with a second 'arbitrary' grid axis over H*W; the
    # single-pass path below assumes one row group fits comfortably.
    return int(rb), vmem_limit


def drs(x: jax.Array, delta: float) -> jax.Array:
    """DRS forward. x has shape (B, C, H, W) (NCHW, matching PyTorch)."""
    b, c, h, w = x.shape
    bc = b * c
    hw = h * w
    dtype = x.dtype

    # 2-D view: no lane padding — the BlockSpec's last dim equals the full
    # array dim, which satisfies the (8,128) rule for any H*W. Padded lanes
    # inside the VMEM tile are masked by Mosaic in the row-max and the store.
    x2 = x.reshape(bc, hw)

    rb, vmem_limit = _pick_row_block(bc, hw, dtype)
    grid = (pl.cdiv(bc, rb),)   # partial last row block handled by masking
                                # (rows are independent, so padding is harmless)

    kernel = functools.partial(_drs_kernel, delta=float(delta))

    out2 = pl.pallas_call(
        kernel,
        out_shape=jax.ShapeDtypeStruct((bc, hw), dtype),
        grid_spec=pltpu.PrefetchScalarGridSpec(
            num_scalar_prefetch=0,
            grid=grid,
            in_specs=[pl.BlockSpec((rb, hw), lambda i: (i, 0))],
            out_specs=pl.BlockSpec((rb, hw), lambda i: (i, 0)),
        ),
        # Input and output now have identical shape/dtype: alias them so a
        # donated in-network call runs in place (XLA inserts a defensive copy
        # when the input is not donated, so correctness is unaffected here).
        input_output_aliases={0: 0},
        compiler_params=pltpu.CompilerParams(
            dimension_semantics=("parallel",),
            vmem_limit_bytes=vmem_limit,
        ),
    )(x2)

    return out2.reshape(b, c, h, w)


def drs_reference(x: jax.Array, delta: float) -> jax.Array:
    """Pure-JAX reference matching the PyTorch forward."""
    x = jnp.maximum(x, 0.0)
    x_max = jnp.max(x, axis=(2, 3), keepdims=True)
    return jnp.minimum(x, x_max * delta)


if __name__ == "__main__":
    delta = 0.55  # hyperparameter (non-learnable)
    key = jax.random.PRNGKey(0)

    # Primary small shape (lane-aligned H*W) plus an unaligned-H*W / partial
    # last-row-block shape to exercise the masked paths real CNN maps hit.
    shapes = [(2, 4, 16, 16), (3, 5, 14, 14)]
    for i, shape in enumerate(shapes):
        k = jax.random.fold_in(key, i)
        x = jax.random.normal(k, shape, dtype=jnp.float32)

        out = jax.block_until_ready(drs(x, delta))
        ref = drs_reference(x, delta)

        assert out.shape == x.shape
        assert jnp.allclose(out, ref, atol=1e-6, rtol=1e-6), f"mismatch at {shape}"

    print("KERNEL_OK")
</pallas_src>

<mosaic_0001>
module attributes {stable_mosaic.version = 11 : i64} {
  func.func @_drs_kernel(%arg0: i32, %arg1: memref<8x256xf32, #tpu.memory_space<vmem>>, %arg2: memref<8x256xf32, #tpu.memory_space<vmem>>) attributes {dimension_semantics = [#tpu.dimension_semantics<parallel>], iteration_bounds = array<i64: 1>, scalar_prefetch = 0 : i64, scratch_operands = 0 : i64, tpu.core_type = #tpu.core_type<tc>, window_params = [{transform_indices = @transform_0, window_bounds = array<i64: 8, 256>}, {transform_indices = @transform_1, window_bounds = array<i64: 8, 256>}]} {
    %c0 = arith.constant 0 : index
    %c0_0 = arith.constant 0 : index
    %0 = vector.load %arg1[%c0, %c0_0] : memref<8x256xf32, #tpu.memory_space<vmem>>, vector<8x256xf32>
    %cst = arith.constant 0.000000e+00 : f32
    %1 = vector.broadcast %cst : f32 to vector<8x256xf32>
    %2 = arith.maximumf %0, %1 : vector<8x256xf32>
    %cst_1 = arith.constant dense<0xFF800000> : vector<8xf32>
    %3 = vector.multi_reduction <maximumf>, %2, %cst_1 [1] : vector<8x256xf32> to vector<8xf32>
    %4 = vector.shape_cast %3 : vector<8xf32> to vector<8x1xf32>
    %cst_2 = arith.constant 5.500000e-01 : f32
    %5 = vector.broadcast %cst_2 : f32 to vector<8x1xf32>
    %6 = arith.mulf %4, %5 : vector<8x1xf32>
    %7 = vector.broadcast %6 : vector<8x1xf32> to vector<8x256xf32>
    %8 = arith.minimumf %2, %7 : vector<8x256xf32>
    %c0_3 = arith.constant 0 : index
    %c0_4 = arith.constant 0 : index
    %9 = vector.load %arg2[%c0_3, %c0_4] : memref<8x256xf32, #tpu.memory_space<vmem>>, vector<8x256xf32>
    tpu.vector_store %arg2[%c0_3, %c0_4], %8 {strides = array<i32>} : memref<8x256xf32, #tpu.memory_space<vmem>>, vector<8x256xf32>,
    return
  }
  func.func @transform_0(%arg0: i32) -> (i32, i32) {
    %c0_i32 = arith.constant 0 : i32
    %c0_i32_0 = arith.constant 0 : i32
    return %arg0, %c0_i32 : i32, i32
  }
  func.func @transform_1(%arg0: i32) -> (i32, i32) {
    %c0_i32 = arith.constant 0 : i32
    %c0_i32_0 = arith.constant 0 : i32
    return %arg0, %c0_i32 : i32, i32
  }
}

</mosaic_0001>

<llo_original>
// kernel: tpu_custom_call.1
$region0: #{tpu_custom_call.1}
  #allocation0 [shape = 'u32[]', space=smem, size = 0x4, offset = 0x4, fixed_abs, tag = 'smem constant byte address 0x4 - core index']
  #allocation1 [shape = 'u32[72,128]{1,0:T(1,128)}', space=vmem, size = 0x9000, scoped, tag = 'internal scratch']
  %s0 = inlined_call_operand.hbm [shape: f32[8,256], index: 0, kind: input, shape index: {}, may-alias: {0,1}]
  %s1 = inlined_call_operand.hbm [shape: f32[8,256], index: 1, kind: output, shape index: {}, may-alias: {0,1}]
  %s2 = sld [smem:[#allocation0]]
  $region18: #{tpu_custom_call.1} parent=0
    _
  %s4 = ssub.s32 1, %s2
  %s5 = scalar_select 0, %s4, %s2
  $region1: #{tpu_custom_call.1} parent=0
    #allocation2 [shape = 'u8[8192]{0}', space=vmem, size = 0x2000, scoped, tag = 'input window, operand 0, single buffered']
    #allocation3 [shape = 's32[1]{0}', space=sflag, size = 0x4, scoped, tag = 'scoped memory for tpu_custom_call.1']
    #allocation4 [shape = 's32[1]{0}', space=sflag, size = 0x4, scoped, tag = 'scoped memory for tpu_custom_call.1']
    #allocation5 [shape = 'u8[8192]{0}', space=vmem, size = 0x2000, scoped, tag = 'output window, operand 0, single buffered']
    %6 = vsyncpa [#allocation3], 0
    %7 = vsyncpa [#allocation4], 0
    // Predicated region
    $region2: #{tpu_custom_call.1} parent=1 // pred_check
      _
    $region3: #{tpu_custom_call.1} parent=1 // pred_check_branch
      %9 = sbr.rel (0) target = $region5
    $region4: #{tpu_custom_call.1} parent=1 // pred_region
      %11 = vsyncadd [#allocation3], 0
      %s13 = sshll.u32 %s0, 4
      %s14 = int_to_ptr.hbm [resolvable:$true] %s13
      %s15 = sshll.u32 [#allocation2], 4
      %s16 = int_to_ptr.vmem [resolvable:$true] %s15
      %18 = dma.hbm_to_vmem [thread:$0]  %s14, 256, %s16, [#allocation3]
    $region5: #{tpu_custom_call.1} parent=1 // pred_fallthru
      _
    // Predicated region
    $region6: #{tpu_custom_call.1} parent=1 // pred_check
      _
    $region7: #{tpu_custom_call.1} parent=1 // pred_check_branch
      %20 = sbr.rel (0) target = $region9
    $region8: #{tpu_custom_call.1} parent=1 // pred_region
      %22 = dma.done [#allocation3], 256
    $region9: #{tpu_custom_call.1} parent=1 // pred_fallthru
      _
    %v23 = vld [vmem:[#allocation2] sm:$0xff]
    %v24 = vld [vmem:[#allocation2 + $0x8] sm:$0xff]
    %v25 = vmax.f32 %v23, 0.0
    %v26 = vmax.f32 %v24, 0.0
    %v27 = vmax.f32 %v25, %v26
    %28 = vmax.xlane.f32.xlu0 %v27
    %v29 = vpop.xlane.xlu0 %28
    %v30 = vmul.f32 %v29, 0.55
    %v31 = vmin.f32 %v25, %v30
    %v32 = vmin.f32 %v26, %v30
    %33 = vst [vmem:[#allocation5] sm:$0xff] %v31
    %34 = vst [vmem:[#allocation5 + $0x8] sm:$0xff] %v32
    // Predicated region
    $region10: #{tpu_custom_call.1} parent=1 // pred_check
      _
    $region11: #{tpu_custom_call.1} parent=1 // pred_check_branch
      %36 = sbr.rel (0) target = $region13
    $region12: #{tpu_custom_call.1} parent=1 // pred_region
      %38 = vsyncadd [#allocation4], 0
      %s40 = sshll.u32 [#allocation5], 4
      %s41 = int_to_ptr.vmem [resolvable:$true] %s40
      %s42 = sshll.u32 %s1, 4
      %s43 = int_to_ptr.hbm [resolvable:$true] %s42
      %45 = dma.vmem_to_hbm [thread:$0]  %s41, 256, %s43, [#allocation4]
    $region13: #{tpu_custom_call.1} parent=1 // pred_fallthru
      _
    // Predicated region
    $region14: #{tpu_custom_call.1} parent=1 // pred_check
      _
    $region15: #{tpu_custom_call.1} parent=1 // pred_check_branch
      %47 = sbr.rel (0) target = $region17
    $region16: #{tpu_custom_call.1} parent=1 // pred_region
      %49 = dma.done [#allocation4], 256
    $region17: #{tpu_custom_call.1} parent=1 // pred_fallthru
      _
    %50 = vsyncpa [#allocation3], 1
    %51 = vsyncpa [#allocation4], 1

</llo_original>
